<compile_context>
chip_gen: v7x
topology: tpu7x:2x2x1
jax: 0.10.0
libtpu: 0.0.40
codegen_flags: <defaults>
</compile_context>

<pallas_src>
import functools

import jax
import jax.numpy as jnp
from jax.experimental import pallas as pl
from jax.experimental.pallas import tpu as pltpu

NUM_STATES = 15          # HopperBulletEnv-v0 observation size
FC1 = 32
FC2 = 32

LANES = 128
FEAT_PAD = -(-(NUM_STATES + 1) // 8) * 8   # 16 = 15 states + constant-1 row, 8-aligned
ONES_ROW = NUM_STATES                      # row 15 of x^T holds 1.0 (bias rider)
H1_ONES = FC1                              # layer-1 output row 32 is forced to 1.0
H2_ONES = FC2                              # layer-2 output row 32 is forced to 1.0

_W1T_OFF = 0             # slab rows   0:128 -> W1^T (out x in); b1 folded into col ONES_ROW
_W2T_OFF = 128           # slab rows 128:256 -> W2^T;            b2 folded into col H1_ONES
_W3T_OFF = 256           # slab rows 256:264 -> W3^T (row 0);    b3 folded into col H2_ONES
_SLAB_ROWS = 264         # multiple of 8 sublanes

assert FEAT_PAD <= LANES and FC1 + 1 <= LANES and FC2 + 1 <= LANES


def _round_up(x, m):
    return -(-x // m) * m


def _critic_kernel(x_ref, slab_ref, o_ref):
    """Fused transposed 3-layer MLP; batch on lanes, no in-kernel transposes.

    x_ref    : (FEAT_PAD, bb) f32  states^T, row ONES_ROW == 1.0
    slab_ref : (264, 128)     f32  packed W1^T / W2^T / W3^T, biases folded in
    o_ref    : (8, bb)        f32  row 0 = critic values (lane-dense output)
    """
    xT = x_ref[...]                                          # (16, bb)
    w1t = slab_ref[_W1T_OFF:_W1T_OFF + LANES, 0:FEAT_PAD]    # (128, 16)
    w2t = slab_ref[_W2T_OFF:_W2T_OFF + LANES, :]             # (128, 128)
    w3t = slab_ref[_W3T_OFF:_W3T_OFF + 8, :]                 # (8, 128)

    h1 = jnp.maximum(jnp.dot(w1t, xT, preferred_element_type=jnp.float32), 0.0)
    h2 = jnp.maximum(jnp.dot(w2t, h1, preferred_element_type=jnp.float32), 0.0)
    out = jnp.dot(w3t, h2, preferred_element_type=jnp.float32)
    o_ref[...] = out.astype(o_ref.dtype)


def _run_single_block(x_t, slab):
    """Grid-free call: whole problem lives in VMEM for one fused invocation."""
    bp = x_t.shape[1]
    vmem = pl.BlockSpec(memory_space=pltpu.MemorySpace.VMEM)
    return pl.pallas_call(
        _critic_kernel,
        out_shape=jax.ShapeDtypeStruct((8, bp), jnp.float32),
        in_specs=[vmem, vmem],
        out_specs=vmem,
    )(x_t, slab)


def _run_gridded(x_t, slab, block_b):
    """Batch-gridded call: resident weights, batch lanes sharded across cores."""
    bp = x_t.shape[1]
    # Guarantee >= 2 grid steps so dual-TensorCore parts (v7x) both get work.
    block_eff = max(LANES, min(block_b, _round_up(-(-bp // 2), LANES)))
    grid_b = pl.cdiv(bp, block_eff)          # ragged last block is fine: columns
    return pl.pallas_call(                   # are independent, OOB writes dropped
        _critic_kernel,
        out_shape=jax.ShapeDtypeStruct((8, bp), jnp.float32),
        grid=(grid_b,),
        in_specs=[
            pl.BlockSpec((FEAT_PAD, block_eff), lambda i: (0, i)),
            pl.BlockSpec((_SLAB_ROWS, LANES), lambda i: (0, 0)),   # resident weights
        ],
        out_specs=pl.BlockSpec((8, block_eff), lambda i: (0, i)),
        compiler_params=pltpu.CompilerParams(
            dimension_semantics=("parallel",)),
    )(x_t, slab)


@functools.partial(jax.jit, static_argnames=("block_b", "single_block_rows"))
def critic_forward_batched(states_batch, slab, *, block_b=2048,
                           single_block_rows=1024):
    """states_batch: (B, NUM_STATES) f32. Returns (B,) f32 critic values.

    block_b: lanes per grid step (multiple of 128).  single_block_rows: largest
    B handled by the grid-free path (raise on v5e/v6e, lower on v7x).
    """
    assert block_b % LANES == 0
    xb = jnp.asarray(states_batch, jnp.float32)
    b, n = xb.shape
    assert n == NUM_STATES

    bp = _round_up(b, LANES)                       # lane-dense padding only
    x_t = jnp.zeros((FEAT_PAD, bp), jnp.float32)
    x_t = x_t.at[ONES_ROW, :].set(1.0)             # constant-1 bias rider row
    x_t = x_t.at[:n, :b].set(xb.T)                 # dense 16-row (not 128) input

    if b <= single_block_rows:
        out = _run_single_block(x_t, slab)
    else:
        out = _run_gridded(x_t, slab, block_b)
    return out[0, :b]                              # contiguous row slice


def critic_forward(states_input, slab):
    """Module-faithful API: (NUM_STATES,) -> (1,) (== PyTorch OUTPUT[0])."""
    x = jnp.asarray(states_input, jnp.float32).reshape(1, -1)   # unsqueeze(., 0)
    return critic_forward_batched(x, slab)


def pack_params(params):
    """Pack (W1,b1,W2,b2,W3,b3) into one (264,128) f32 slab of transposed
    weights with the biases folded in via constant-1 rider rows/units."""
    w1, b1, w2, b2, w3, b3 = [jnp.asarray(p, jnp.float32) for p in params]
    b1, b2, b3 = b1.reshape(-1), b2.reshape(-1), b3.reshape(-1)
    assert w1.shape == (NUM_STATES, FC1) and w2.shape == (FC1, FC2)
    assert w3.shape == (FC2, 1)

    slab = jnp.zeros((_SLAB_ROWS, LANES), jnp.float32)
    # Layer 1: h1 = relu(W1^T @ x^T + b1); x^T row ONES_ROW == 1.
    slab = slab.at[_W1T_OFF:_W1T_OFF + FC1, :NUM_STATES].set(w1.T)
    slab = slab.at[_W1T_OFF:_W1T_OFF + FC1, ONES_ROW].set(b1)
    slab = slab.at[_W1T_OFF + H1_ONES, ONES_ROW].set(1.0)      # h1[H1_ONES] == 1
    # Layer 2: h2 = relu(W2^T @ h1 + b2); h1 row H1_ONES == 1.
    slab = slab.at[_W2T_OFF:_W2T_OFF + FC2, :FC1].set(w2.T)
    slab = slab.at[_W2T_OFF:_W2T_OFF + FC2, H1_ONES].set(b2)
    slab = slab.at[_W2T_OFF + H2_ONES, H1_ONES].set(1.0)       # h2[H2_ONES] == 1
    # Layer 3: out = W3^T @ h2 + b3; h2 row H2_ONES == 1.
    slab = slab.at[_W3T_OFF, :FC2].set(w3[:, 0])
    slab = slab.at[_W3T_OFF, H2_ONES].set(b3[0])
    return slab


def init_params(key):
    """Deterministic init mimicking nn.Linear default: U(-1/sqrt(fan_in), 1/sqrt(fan_in))."""
    def linear(key, fan_in, fan_out):
        kw, kb = jax.random.split(key)
        bound = 1.0 / jnp.sqrt(jnp.float32(fan_in))
        w = jax.random.uniform(kw, (fan_in, fan_out), jnp.float32, -bound, bound)
        b = jax.random.uniform(kb, (1, fan_out), jnp.float32, -bound, bound)
        return w, b

    k1, k2, k3 = jax.random.split(key, 3)
    w1, b1 = linear(k1, NUM_STATES, FC1)
    w2, b2 = linear(k2, FC1, FC2)
    w3, b3 = linear(k3, FC2, 1)
    return (w1, b1, w2, b2, w3, b3)


def _reference_batched(states_batch, params):
    w1, b1, w2, b2, w3, b3 = params
    x = jnp.asarray(states_batch, jnp.float32)
    h1 = jnp.maximum(x @ w1 + b1, 0.0)
    h2 = jnp.maximum(h1 @ w2 + b2, 0.0)
    return (h2 @ w3 + b3)[:, 0]


if __name__ == "__main__":
    key = jax.random.PRNGKey(0)
    k_params, k_state, k_batch = jax.random.split(key, 3)

    params = init_params(k_params)
    slab = pack_params(params)

    # --- Module-faithful single-state forward (matches PyTorch forward) ---
    states = jax.random.normal(k_state, (NUM_STATES,), jnp.float32)
    out1 = jax.block_until_ready(critic_forward(states, slab))
    ref1 = _reference_batched(states.reshape(1, -1), params)
    assert out1.shape == (1,), out1.shape
    assert jnp.allclose(out1, ref1, atol=1e-4, rtol=1e-4), (out1, ref1)

    # --- Small batch: grid-free single-block (VMEM-resident) path ---
    B1 = 300
    batch1 = jax.random.normal(k_batch, (B1, NUM_STATES), jnp.float32)
    o1 = jax.block_until_ready(critic_forward_batched(batch1, slab))
    r1 = _reference_batched(batch1, params)
    assert o1.shape == (B1,), o1.shape
    assert jnp.allclose(o1, r1, atol=1e-4, rtol=1e-4), float(jnp.max(jnp.abs(o1 - r1)))

    # --- Larger batch: gridded, megacore-parallel path incl. ragged last block ---
    B2 = 1000
    batch2 = jax.random.normal(jax.random.fold_in(k_batch, 1),
                               (B2, NUM_STATES), jnp.float32)
    o2 = jax.block_until_ready(
        critic_forward_batched(batch2, slab, block_b=384, single_block_rows=128))
    r2 = _reference_batched(batch2, params)
    assert o2.shape == (B2,), o2.shape
    assert jnp.allclose(o2, r2, atol=1e-4, rtol=1e-4), float(jnp.max(jnp.abs(o2 - r2)))

    print("KERNEL_OK")
</pallas_src>

<mosaic_0001>
module attributes {stable_mosaic.version = 11 : i64} {
  func.func @_critic_kernel(%arg0: memref<16x128xf32, #tpu.memory_space<vmem>>, %arg1: memref<264x128xf32, #tpu.memory_space<vmem>>, %arg2: memref<8x128xf32, #tpu.memory_space<vmem>>) attributes {dimension_semantics = [], scalar_prefetch = 0 : i64, scratch_operands = 0 : i64, tpu.core_type = #tpu.core_type<tc>} {
    %c0 = arith.constant 0 : index
    %c0_0 = arith.constant 0 : index
    %0 = vector.load %arg0[%c0, %c0_0] : memref<16x128xf32, #tpu.memory_space<vmem>>, vector<16x128xf32>
    %c0_1 = arith.constant 0 : index
    %c0_2 = arith.constant 0 : index
    %1 = vector.load %arg1[%c0_1, %c0_2] : memref<264x128xf32, #tpu.memory_space<vmem>>, vector<128x16xf32>
    %c128 = arith.constant 128 : index
    %c0_3 = arith.constant 0 : index
    %2 = vector.load %arg1[%c128, %c0_3] : memref<264x128xf32, #tpu.memory_space<vmem>>, vector<128x128xf32>
    %c256 = arith.constant 256 : index
    %c0_4 = arith.constant 0 : index
    %3 = vector.load %arg1[%c256, %c0_4] : memref<264x128xf32, #tpu.memory_space<vmem>>, vector<8x128xf32>
    %cst = arith.constant dense<0.000000e+00> : vector<128x128xf32>
    %4 = tpu.matmul %1, %0, %cst {dimension_numbers = #tpu.dot_dimension_numbers<[1], [0], [0], [1], [0, 0, 1, 1], [], []>} : vector<128x16xf32>, vector<16x128xf32>, vector<128x128xf32> -> vector<128x128xf32>
    %cst_5 = arith.constant 0.000000e+00 : f32
    %5 = vector.broadcast %cst_5 : f32 to vector<128x128xf32>
    %6 = arith.maximumf %4, %5 : vector<128x128xf32>
    %cst_6 = arith.constant dense<0.000000e+00> : vector<128x128xf32>
    %7 = tpu.matmul %2, %6, %cst_6 {dimension_numbers = #tpu.dot_dimension_numbers<[1], [0], [0], [1], [0, 0, 1, 1], [], []>} : vector<128x128xf32>, vector<128x128xf32>, vector<128x128xf32> -> vector<128x128xf32>
    %cst_7 = arith.constant 0.000000e+00 : f32
    %8 = vector.broadcast %cst_7 : f32 to vector<128x128xf32>
    %9 = arith.maximumf %7, %8 : vector<128x128xf32>
    %cst_8 = arith.constant dense<0.000000e+00> : vector<8x128xf32>
    %10 = tpu.matmul %3, %9, %cst_8 {dimension_numbers = #tpu.dot_dimension_numbers<[1], [0], [0], [1], [0, 0, 1, 1], [], []>} : vector<8x128xf32>, vector<128x128xf32>, vector<8x128xf32> -> vector<8x128xf32>
    %c0_9 = arith.constant 0 : index
    %c0_10 = arith.constant 0 : index
    %11 = vector.load %arg2[%c0_9, %c0_10] : memref<8x128xf32, #tpu.memory_space<vmem>>, vector<8x128xf32>
    tpu.vector_store %arg2[%c0_9, %c0_10], %10 {strides = array<i32>} : memref<8x128xf32, #tpu.memory_space<vmem>>, vector<8x128xf32>,
    return
  }
}

</mosaic_0001>

<llo_original>
// kernel: critic_forward_batched.1
$region0: #{critic_forward_batched.1}
  #allocation0 [shape = 'u32[]', space=smem, size = 0x4, offset = 0x4, fixed_abs, tag = 'smem constant byte address 0x4 - core index']
  #allocation1 [shape = 'u32[144,128]{1,0:T(1,128)}', space=vmem, size = 0x12000, scoped, tag = 'internal scratch']
  %s0 = inlined_call_operand.vmem [shape: f32[16,128], index: 0, kind: input, shape index: {}]
  %s1 = inlined_call_operand.hbm [shape: f32[264,128], index: 1, kind: input, shape index: {}]
  %s2 = inlined_call_operand.vmem [shape: f32[8,128], index: 2, kind: output, shape index: {}]
  %s3 = sld [smem:[#allocation0]]
  $region22: #{critic_forward_batched.1} parent=0
    _
  %s5 = ssub.s32 1, %s3
  %s6 = scalar_select 0, %s5, %s3
  $region1: #{critic_forward_batched.1} parent=0
    #allocation2 [shape = 'u8[135168]{0}', space=vmem, size = 0x21000, scoped, tag = 'input window, operand 1, single buffered']
    #allocation3 [shape = 's32[1]{0}', space=sflag, size = 0x4, scoped, tag = 'scoped memory for critic_forward_batched.1']
    %7 = vsyncpa [#allocation3], 0
    // Predicated region
    $region2: #{critic_forward_batched.1} parent=1 // pred_check
      _
    $region3: #{critic_forward_batched.1} parent=1 // pred_check_branch
      %9 = sbr.rel (0) target = $region5
    $region4: #{critic_forward_batched.1} parent=1 // pred_region
      _
    $region5: #{critic_forward_batched.1} parent=1 // pred_fallthru
      _
    // Predicated region
    $region6: #{critic_forward_batched.1} parent=1 // pred_check
      _
    $region7: #{critic_forward_batched.1} parent=1 // pred_check_branch
      %11 = sbr.rel (0) target = $region9
    $region8: #{critic_forward_batched.1} parent=1 // pred_region
      %s13 = ssub.s32 4224, 4224
      %14 = vsyncadd [#allocation3], %s13
      %s15 = sshll.u32 [#allocation2], 4
      %s16 = int_to_ptr.vmem [resolvable:$true] %s15
      %21 = dma.hbm_to_vmem [thread:$0]  %s1, 4224, %s16, [#allocation3], 128, 128, 8
    $region9: #{critic_forward_batched.1} parent=1 // pred_fallthru
      _
    // Predicated region
    $region10: #{critic_forward_batched.1} parent=1 // pred_check
      _
    $region11: #{critic_forward_batched.1} parent=1 // pred_check_branch
      %23 = sbr.rel (0) target = $region13
    $region12: #{critic_forward_batched.1} parent=1 // pred_region
      %24 = dma.done [#allocation3], 4224
    $region13: #{critic_forward_batched.1} parent=1 // pred_fallthru
      _
    %v25 = vld [vmem:[%s0] sm:$0xff]
    %v26 = vld [vmem:[%s0 + $0x8] sm:$0xff]
    %v27 = vld [vmem:[#allocation2] sm:$0xff]
    %v28 = vld [vmem:[#allocation2 + $0x8] sm:$0xff]
    %v29 = vld [vmem:[#allocation2 + $0x10] sm:$0xff]
    %v30 = vld [vmem:[#allocation2 + $0x18] sm:$0xff]
    %v31 = vld [vmem:[#allocation2 + $0x20] sm:$0xff]
    %v32 = vld [vmem:[#allocation2 + $0x28] sm:$0xff]
    %v33 = vld [vmem:[#allocation2 + $0x30] sm:$0xff]
    %v34 = vld [vmem:[#allocation2 + $0x38] sm:$0xff]
    %v35 = vld [vmem:[#allocation2 + $0x40] sm:$0xff]
    %v36 = vld [vmem:[#allocation2 + $0x48] sm:$0xff]
    %v37 = vld [vmem:[#allocation2 + $0x50] sm:$0xff]
    %v38 = vld [vmem:[#allocation2 + $0x58] sm:$0xff]
    %v39 = vld [vmem:[#allocation2 + $0x60] sm:$0xff]
    %v40 = vld [vmem:[#allocation2 + $0x68] sm:$0xff]
    %v41 = vld [vmem:[#allocation2 + $0x70] sm:$0xff]
    %v42 = vld [vmem:[#allocation2 + $0x78] sm:$0xff]
    %v43 = vld [vmem:[#allocation2 + $0x80] sm:$0xff]
    %v44 = vld [vmem:[#allocation2 + $0x88] sm:$0xff]
    %v45 = vld [vmem:[#allocation2 + $0x90] sm:$0xff]
    %v46 = vld [vmem:[#allocation2 + $0x98] sm:$0xff]
    %v47 = vld [vmem:[#allocation2 + $0xa0] sm:$0xff]
    %v48 = vld [vmem:[#allocation2 + $0xa8] sm:$0xff]
    %v49 = vld [vmem:[#allocation2 + $0xb0] sm:$0xff]
    %v50 = vld [vmem:[#allocation2 + $0xb8] sm:$0xff]
    %v51 = vld [vmem:[#allocation2 + $0xc0] sm:$0xff]
    %v52 = vld [vmem:[#allocation2 + $0xc8] sm:$0xff]
    %v53 = vld [vmem:[#allocation2 + $0xd0] sm:$0xff]
    %v54 = vld [vmem:[#allocation2 + $0xd8] sm:$0xff]
    %v55 = vld [vmem:[#allocation2 + $0xe0] sm:$0xff]
    %v56 = vld [vmem:[#allocation2 + $0xe8] sm:$0xff]
    %v57 = vld [vmem:[#allocation2 + $0xf0] sm:$0xff]
    %v58 = vld [vmem:[#allocation2 + $0xf8] sm:$0xff]
    %v59 = vld [vmem:[#allocation2 + $0x100] sm:$0xff]
    %vm60 = vcmask 130048
    %v62 = vsel %vm60, %v27, 0
    %v65 = vsel %vm60, %v28, 0
    %v68 = vsel %vm60, %v29, 0
    %v71 = vsel %vm60, %v30, 0
    %v74 = vsel %vm60, %v31, 0
    %v77 = vsel %vm60, %v32, 0
    %v80 = vsel %vm60, %v33, 0
    %v83 = vsel %vm60, %v34, 0
    %v86 = vsel %vm60, %v35, 0
    %v89 = vsel %vm60, %v36, 0
    %v92 = vsel %vm60, %v37, 0
    %v95 = vsel %vm60, %v38, 0
    %v98 = vsel %vm60, %v39, 0
    %v101 = vsel %vm60, %v40, 0
    %v104 = vsel %vm60, %v41, 0
    %v107 = vsel %vm60, %v42, 0
    %109 = vmatprep.subr.mxu0 0.0
    %110 = vmatpush1.msra.mxu0 %v25
    %111 = vmatprep.subr.mxu0 0.0
    %112 = vmatpush1.msra.mxu0 %v26
    %113 = vmatprep.subr.mxu0 0.0
    %114 = vmatpush1.msra.mxu0 0.0
    %115 = vmatprep.subr.mxu0 0.0
    %116 = vmatpush1.msra.mxu0 0.0
    %117 = vmatprep.subr.mxu0 0.0
    %118 = vmatpush1.msra.mxu0 0.0
    %119 = vmatprep.subr.mxu0 0.0
    %120 = vmatpush1.msra.mxu0 0.0
    %121 = vmatprep.subr.mxu0 0.0
    %122 = vmatpush1.msra.mxu0 0.0
    %123 = vmatprep.subr.mxu0 0.0
    %124 = vmatpush1.msra.mxu0 0.0
    %125 = vmatprep.subr.mxu0 0.0
    %126 = vmatpush1.msra.mxu0 0.0
    %127 = vmatprep.subr.mxu0 0.0
    %128 = vmatpush1.msra.mxu0 0.0
    %129 = vmatprep.subr.mxu0 0.0
    %130 = vmatpush1.msra.mxu0 0.0
    %131 = vmatprep.subr.mxu0 0.0
    %132 = vmatpush1.msra.mxu0 0.0
    %133 = vmatprep.subr.mxu0 0.0
    %134 = vmatpush1.msra.mxu0 0.0
    %135 = vmatprep.subr.mxu0 0.0
    %136 = vmatpush1.msra.mxu0 0.0
    %137 = vmatprep.subr.mxu0 0.0
    %138 = vmatpush1.msra.mxu0 0.0
    %139 = vmatprep.subr.mxu0 0.0
    %140 = vmatpush1.msra.mxu0 0.0
    %141 = vmatprep.subr.mxu0 0.0
    %142 = vmatpush1.msra.mxu0 0.0
    %143 = vmatprep.subr.mxu0 0.0
    %144 = vmatpush1.msra.mxu0 0.0
    %145 = vmatprep.subr.mxu0 0.0
    %146 = vmatpush1.msra.mxu0 0.0
    %147 = vmatprep.subr.mxu0 0.0
    %148 = vmatpush1.msra.mxu0 0.0
    %149 = vmatprep.subr.mxu0 0.0
    %150 = vmatpush1.msra.mxu0 0.0
    %151 = vmatprep.subr.mxu0 0.0
    %152 = vmatpush1.msra.mxu0 0.0
    %153 = vmatprep.subr.mxu0 0.0
    %154 = vmatpush1.msra.mxu0 0.0
    %155 = vmatprep.subr.mxu0 0.0
    %156 = vmatpush1.msra.mxu0 0.0
    %157 = vmatprep.subr.mxu0 0.0
    %158 = vmatpush1.msra.mxu0 0.0
    %159 = vmatprep.subr.mxu0 0.0
    %160 = vmatpush1.msra.mxu0 0.0
    %161 = vmatprep.subr.mxu0 0.0
    %162 = vmatpush1.msra.mxu0 0.0
    %163 = vmatprep.subr.mxu0 0.0
    %164 = vmatpush1.msra.mxu0 0.0
    %165 = vmatprep.subr.mxu0 0.0
    %166 = vmatpush1.msra.mxu0 0.0
    %167 = vmatprep.subr.mxu0 0.0
    %168 = vmatpush1.msra.mxu0 0.0
    %169 = vmatprep.subr.mxu0 0.0
    %170 = vmatpush1.msra.mxu0 0.0
    %171 = vmatprep.subr.mxu0 0.0
    %172 = vmatpush1.msra.mxu0 0.0
    %173 = vmatprep.mubr.f32.mxu0 0.0
    %174 = vmatmul.mubr.f32.gmra.mrb[0].mxu0 %v62
    %v175 = vpop.f32.mrb[0].mxu0
    %v176 = vadd.f32 0.0, %v175
    %v177 = vpop.f32.mrb[0].mxu0
    %178 = vmatprep.mubr.f32.mxu0 0.0
    %179 = vmatmul.mubr.f32.gmra.mrb[0].mxu0 %v65
    %v180 = vpop.f32.mrb[0].mxu0
    %v181 = vadd.f32 0.0, %v180
    %v182 = vpop.f32.mrb[0].mxu0
    %183 = vmatprep.mubr.f32.mxu0 0.0
    %184 = vmatmul.mubr.f32.gmra.mrb[0].mxu0 %v68
    %v185 = vpop.f32.mrb[0].mxu0
    %v186 = vadd.f32 0.0, %v185
    %v187 = vpop.f32.mrb[0].mxu0
    %188 = vmatprep.mubr.f32.mxu0 0.0
    %189 = vmatmul.mubr.f32.gmra.mrb[0].mxu0 %v71
    %v190 = vpop.f32.mrb[0].mxu0
    %v191 = vadd.f32 0.0, %v190
    %v192 = vpop.f32.mrb[0].mxu0
    %193 = vmatprep.mubr.f32.mxu0 0.0
    %194 = vmatmul.mubr.f32.gmra.mrb[0].mxu0 %v74
    %v195 = vpop.f32.mrb[0].mxu0
    %v196 = vadd.f32 0.0, %v195
    %v197 = vpop.f32.mrb[0].mxu0
    %198 = vmatprep.mubr.f32.mxu0 0.0
    %199 = vmatmul.mubr.f32.gmra.mrb[0].mxu0 %v77
    %v200 = vpop.f32.mrb[0].mxu0
    %v201 = vadd.f32 0.0, %v200
    %v202 = vpop.f32.mrb[0].mxu0
    %203 = vmatprep.mubr.f32.mxu0 0.0
    %204 = vmatmul.mubr.f32.gmra.mrb[0].mxu0 %v80
    %v205 = vpop.f32.mrb[0].mxu0
    %v206 = vadd.f32 0.0, %v205
    %v207 = vpop.f32.mrb[0].mxu0
    %208 = vmatprep.mubr.f32.mxu0 0.0
    %209 = vmatmul.mubr.f32.gmra.mrb[0].mxu0 %v83
    %v210 = vpop.f32.mrb[0].mxu0
    %v211 = vadd.f32 0.0, %v210
    %v212 = vpop.f32.mrb[0].mxu0
    %213 = vmatprep.mubr.f32.mxu0 0.0
    %214 = vmatmul.mubr.f32.gmra.mrb[0].mxu0 %v86
    %v215 = vpop.f32.mrb[0].mxu0
    %v216 = vadd.f32 0.0, %v215
    %v217 = vpop.f32.mrb[0].mxu0
    %218 = vmatprep.mubr.f32.mxu0 0.0
    %219 = vmatmul.mubr.f32.gmra.mrb[0].mxu0 %v89
    %v220 = vpop.f32.mrb[0].mxu0
    %v221 = vadd.f32 0.0, %v220
    %v222 = vpop.f32.mrb[0].mxu0
    %223 = vmatprep.mubr.f32.mxu0 0.0
    %224 = vmatmul.mubr.f32.gmra.mrb[0].mxu0 %v92
    %v225 = vpop.f32.mrb[0].mxu0
    %v226 = vadd.f32 0.0, %v225
    %v227 = vpop.f32.mrb[0].mxu0
    %228 = vmatprep.mubr.f32.mxu0 0.0
    %229 = vmatmul.mubr.f32.gmra.mrb[0].mxu0 %v95
    %v230 = vpop.f32.mrb[0].mxu0
    %v231 = vadd.f32 0.0, %v230
    %v232 = vpop.f32.mrb[0].mxu0
    %233 = vmatprep.mubr.f32.mxu0 0.0
    %234 = vmatmul.mubr.f32.gmra.mrb[0].mxu0 %v98
    %v235 = vpop.f32.mrb[0].mxu0
    %v236 = vadd.f32 0.0, %v235
    %v237 = vpop.f32.mrb[0].mxu0
    %238 = vmatprep.mubr.f32.mxu0 0.0
    %239 = vmatmul.mubr.f32.gmra.mrb[0].mxu0 %v101
    %v240 = vpop.f32.mrb[0].mxu0
    %v241 = vadd.f32 0.0, %v240
    %v242 = vpop.f32.mrb[0].mxu0
    %243 = vmatprep.mubr.f32.mxu0 0.0
    %244 = vmatmul.mubr.f32.gmra.mrb[0].mxu0 %v104
    %v245 = vpop.f32.mrb[0].mxu0
    %v246 = vadd.f32 0.0, %v245
    %v247 = vpop.f32.mrb[0].mxu0
    %248 = vmatprep.mubr.f32.mxu0 0.0
    %249 = vmatmul.mubr.f32.gmra.mrb[0].mxu0 %v107
    %v250 = vpop.f32.mrb[0].mxu0
    %v251 = vadd.f32 0.0, %v250
    %v252 = vpop.f32.mrb[0].mxu0
    %253 = vdwg.mxu0
    %v254 = vmax.f32 %v176, 0.0
    %v255 = vmax.f32 %v181, 0.0
    %v256 = vmax.f32 %v186, 0.0
    %v257 = vmax.f32 %v191, 0.0
    %v258 = vmax.f32 %v196, 0.0
    %v259 = vmax.f32 %v201, 0.0
    %v260 = vmax.f32 %v206, 0.0
    %v261 = vmax.f32 %v211, 0.0
    %v262 = vmax.f32 %v216, 0.0
    %v263 = vmax.f32 %v221, 0.0
    %v264 = vmax.f32 %v226, 0.0
    %v265 = vmax.f32 %v231, 0.0
    %v266 = vmax.f32 %v236, 0.0
    %v267 = vmax.f32 %v241, 0.0
    %v268 = vmax.f32 %v246, 0.0
    %v269 = vmax.f32 %v251, 0.0
    %270 = vmatprep.subr.mxu0 0.0
    %271 = vmatpush1.msra.mxu0 %v254
    %272 = vmatprep.subr.mxu0 0.0
    %273 = vmatpush1.msra.mxu0 %v255
    %274 = vmatprep.subr.mxu0 0.0
    %275 = vmatpush1.msra.mxu0 %v256
    %276 = vmatprep.subr.mxu0 0.0
    %277 = vmatpush1.msra.mxu0 %v257
    %278 = vmatprep.subr.mxu0 0.0
    %279 = vmatpush1.msra.mxu0 %v258
    %280 = vmatprep.subr.mxu0 0.0
    %281 = vmatpush1.msra.mxu0 %v259
    %282 = vmatprep.subr.mxu0 0.0
    %283 = vmatpush1.msra.mxu0 %v260
    %284 = vmatprep.subr.mxu0 0.0
    %285 = vmatpush1.msra.mxu0 %v261
    %286 = vmatprep.subr.mxu0 0.0
    %287 = vmatpush1.msra.mxu0 %v262
    %288 = vmatprep.subr.mxu0 0.0
    %289 = vmatpush1.msra.mxu0 %v263
    %290 = vmatprep.subr.mxu0 0.0
    %291 = vmatpush1.msra.mxu0 %v264
    %292 = vmatprep.subr.mxu0 0.0
    %293 = vmatpush1.msra.mxu0 %v265
    %294 = vmatprep.subr.mxu0 0.0
    %295 = vmatpush1.msra.mxu0 %v266
    %296 = vmatprep.subr.mxu0 0.0
    %297 = vmatpush1.msra.mxu0 %v267
    %298 = vmatprep.subr.mxu0 0.0
    %299 = vmatpush1.msra.mxu0 %v268
    %300 = vmatprep.subr.mxu0 0.0
    %301 = vmatpush1.msra.mxu0 %v269
    %302 = vmatprep.subr.mxu0 0.0
    %303 = vmatpush1.msra.mxu0 0.0
    %304 = vmatprep.subr.mxu0 0.0
    %305 = vmatpush1.msra.mxu0 0.0
    %306 = vmatprep.subr.mxu0 0.0
    %307 = vmatpush1.msra.mxu0 0.0
    %308 = vmatprep.subr.mxu0 0.0
    %309 = vmatpush1.msra.mxu0 0.0
    %310 = vmatprep.subr.mxu0 0.0
    %311 = vmatpush1.msra.mxu0 0.0
    %312 = vmatprep.subr.mxu0 0.0
    %313 = vmatpush1.msra.mxu0 0.0
    %314 = vmatprep.subr.mxu0 0.0
    %315 = vmatpush1.msra.mxu0 0.0
    %316 = vmatprep.subr.mxu0 0.0
    %317 = vmatpush1.msra.mxu0 0.0
    %318 = vmatprep.subr.mxu0 0.0
    %319 = vmatpush1.msra.mxu0 0.0
    %320 = vmatprep.subr.mxu0 0.0
    %321 = vmatpush1.msra.mxu0 0.0
    %322 = vmatprep.subr.mxu0 0.0
    %323 = vmatpush1.msra.mxu0 0.0
    %324 = vmatprep.subr.mxu0 0.0
    %325 = vmatpush1.msra.mxu0 0.0
    %326 = vmatprep.subr.mxu0 0.0
    %327 = vmatpush1.msra.mxu0 0.0
    %328 = vmatprep.subr.mxu0 0.0
    %329 = vmatpush1.msra.mxu0 0.0
    %330 = vmatprep.subr.mxu0 0.0
    %331 = vmatpush1.msra.mxu0 0.0
    %332 = vmatprep.subr.mxu0 0.0
    %333 = vmatpush1.msra.mxu0 0.0
    %334 = vmatprep.mubr.f32.mxu0 0.0
    %335 = vmatmul.mubr.f32.gmra.mrb[0].mxu0 %v43
    %v336 = vpop.f32.mrb[0].mxu0
    %v337 = vadd.f32 0.0, %v336
    %v338 = vpop.f32.mrb[0].mxu0
    %339 = vmatprep.mubr.f32.mxu0 0.0
    %340 = vmatmul.mubr.f32.gmra.mrb[0].mxu0 %v44
    %v341 = vpop.f32.mrb[0].mxu0
    %v342 = vadd.f32 0.0, %v341
    %v343 = vpop.f32.mrb[0].mxu0
    %344 = vmatprep.mubr.f32.mxu0 0.0
    %345 = vmatmul.mubr.f32.gmra.mrb[0].mxu0 %v45
    %v346 = vpop.f32.mrb[0].mxu0
    %v347 = vadd.f32 0.0, %v346
    %v348 = vpop.f32.mrb[0].mxu0
    %349 = vmatprep.mubr.f32.mxu0 0.0
    %350 = vmatmul.mubr.f32.gmra.mrb[0].mxu0 %v46
    %v351 = vpop.f32.mrb[0].mxu0
    %v352 = vadd.f32 0.0, %v351
    %v353 = vpop.f32.mrb[0].mxu0
    %354 = vmatprep.mubr.f32.mxu0 0.0
    %355 = vmatmul.mubr.f32.gmra.mrb[0].mxu0 %v47
    %v356 = vpop.f32.mrb[0].mxu0
    %v357 = vadd.f32 0.0, %v356
    %v358 = vpop.f32.mrb[0].mxu0
    %359 = vmatprep.mubr.f32.mxu0 0.0
    %360 = vmatmul.mubr.f32.gmra.mrb[0].mxu0 %v48
    %v361 = vpop.f32.mrb[0].mxu0
    %v362 = vadd.f32 0.0, %v361
    %v363 = vpop.f32.mrb[0].mxu0
    %364 = vmatprep.mubr.f32.mxu0 0.0
    %365 = vmatmul.mubr.f32.gmra.mrb[0].mxu0 %v49
    %v366 = vpop.f32.mrb[0].mxu0
    %v367 = vadd.f32 0.0, %v366
    %v368 = vpop.f32.mrb[0].mxu0
    %369 = vmatprep.mubr.f32.mxu0 0.0
    %370 = vmatmul.mubr.f32.gmra.mrb[0].mxu0 %v50
    %v371 = vpop.f32.mrb[0].mxu0
    %v372 = vadd.f32 0.0, %v371
    %v373 = vpop.f32.mrb[0].mxu0
    %374 = vmatprep.mubr.f32.mxu0 0.0
    %375 = vmatmul.mubr.f32.gmra.mrb[0].mxu0 %v51
    %v376 = vpop.f32.mrb[0].mxu0
    %v377 = vadd.f32 0.0, %v376
    %v378 = vpop.f32.mrb[0].mxu0
    %379 = vmatprep.mubr.f32.mxu0 0.0
    %380 = vmatmul.mubr.f32.gmra.mrb[0].mxu0 %v52
    %v381 = vpop.f32.mrb[0].mxu0
    %v382 = vadd.f32 0.0, %v381
    %v383 = vpop.f32.mrb[0].mxu0
    %384 = vmatprep.mubr.f32.mxu0 0.0
    %385 = vmatmul.mubr.f32.gmra.mrb[0].mxu0 %v53
    %v386 = vpop.f32.mrb[0].mxu0
    %v387 = vadd.f32 0.0, %v386
    %v388 = vpop.f32.mrb[0].mxu0
    %389 = vmatprep.mubr.f32.mxu0 0.0
    %390 = vmatmul.mubr.f32.gmra.mrb[0].mxu0 %v54
    %v391 = vpop.f32.mrb[0].mxu0
    %v392 = vadd.f32 0.0, %v391
    %v393 = vpop.f32.mrb[0].mxu0
    %394 = vmatprep.mubr.f32.mxu0 0.0
    %395 = vmatmul.mubr.f32.gmra.mrb[0].mxu0 %v55
    %v396 = vpop.f32.mrb[0].mxu0
    %v397 = vadd.f32 0.0, %v396
    %v398 = vpop.f32.mrb[0].mxu0
    %399 = vmatprep.mubr.f32.mxu0 0.0
    %400 = vmatmul.mubr.f32.gmra.mrb[0].mxu0 %v56
    %v401 = vpop.f32.mrb[0].mxu0
    %v402 = vadd.f32 0.0, %v401
    %v403 = vpop.f32.mrb[0].mxu0
    %404 = vmatprep.mubr.f32.mxu0 0.0
    %405 = vmatmul.mubr.f32.gmra.mrb[0].mxu0 %v57
    %v406 = vpop.f32.mrb[0].mxu0
    %v407 = vadd.f32 0.0, %v406
    %v408 = vpop.f32.mrb[0].mxu0
    %409 = vmatprep.mubr.f32.mxu0 0.0
    %410 = vmatmul.mubr.f32.gmra.mrb[0].mxu0 %v58
    %v411 = vpop.f32.mrb[0].mxu0
    %v412 = vadd.f32 0.0, %v411
    %v413 = vpop.f32.mrb[0].mxu0
    %414 = vdwg.mxu0
    %v415 = vmax.f32 %v337, 0.0
    %v416 = vmax.f32 %v342, 0.0
    %v417 = vmax.f32 %v347, 0.0
    %v418 = vmax.f32 %v352, 0.0
    %v419 = vmax.f32 %v357, 0.0
    %v420 = vmax.f32 %v362, 0.0
    %v421 = vmax.f32 %v367, 0.0
    %v422 = vmax.f32 %v372, 0.0
    %v423 = vmax.f32 %v377, 0.0
    %v424 = vmax.f32 %v382, 0.0
    %v425 = vmax.f32 %v387, 0.0
    %v426 = vmax.f32 %v392, 0.0
    %v427 = vmax.f32 %v397, 0.0
    %v428 = vmax.f32 %v402, 0.0
    %v429 = vmax.f32 %v407, 0.0
    %v430 = vmax.f32 %v412, 0.0
    %431 = vmatprep.subr.mxu0 0.0
    %432 = vmatpush1.msra.mxu0 %v415
    %433 = vmatprep.subr.mxu0 0.0
    %434 = vmatpush1.msra.mxu0 %v416
    %435 = vmatprep.subr.mxu0 0.0
    %436 = vmatpush1.msra.mxu0 %v417
    %437 = vmatprep.subr.mxu0 0.0
    %438 = vmatpush1.msra.mxu0 %v418
    %439 = vmatprep.subr.mxu0 0.0
    %440 = vmatpush1.msra.mxu0 %v419
    %441 = vmatprep.subr.mxu0 0.0
    %442 = vmatpush1.msra.mxu0 %v420
    %443 = vmatprep.subr.mxu0 0.0
    %444 = vmatpush1.msra.mxu0 %v421
    %445 = vmatprep.subr.mxu0 0.0
    %446 = vmatpush1.msra.mxu0 %v422
    %447 = vmatprep.subr.mxu0 0.0
    %448 = vmatpush1.msra.mxu0 %v423
    %449 = vmatprep.subr.mxu0 0.0
    %450 = vmatpush1.msra.mxu0 %v424
    %451 = vmatprep.subr.mxu0 0.0
    %452 = vmatpush1.msra.mxu0 %v425
    %453 = vmatprep.subr.mxu0 0.0
    %454 = vmatpush1.msra.mxu0 %v426
    %455 = vmatprep.subr.mxu0 0.0
    %456 = vmatpush1.msra.mxu0 %v427
    %457 = vmatprep.subr.mxu0 0.0
    %458 = vmatpush1.msra.mxu0 %v428
    %459 = vmatprep.subr.mxu0 0.0
    %460 = vmatpush1.msra.mxu0 %v429
    %461 = vmatprep.subr.mxu0 0.0
    %462 = vmatpush1.msra.mxu0 %v430
    %463 = vmatprep.subr.mxu0 0.0
    %464 = vmatpush1.msra.mxu0 0.0
    %465 = vmatprep.subr.mxu0 0.0
    %466 = vmatpush1.msra.mxu0 0.0
    %467 = vmatprep.subr.mxu0 0.0
    %468 = vmatpush1.msra.mxu0 0.0
    %469 = vmatprep.subr.mxu0 0.0
    %470 = vmatpush1.msra.mxu0 0.0
    %471 = vmatprep.subr.mxu0 0.0
    %472 = vmatpush1.msra.mxu0 0.0
    %473 = vmatprep.subr.mxu0 0.0
    %474 = vmatpush1.msra.mxu0 0.0
    %475 = vmatprep.subr.mxu0 0.0
    %476 = vmatpush1.msra.mxu0 0.0
    %477 = vmatprep.subr.mxu0 0.0
    %478 = vmatpush1.msra.mxu0 0.0
    %479 = vmatprep.subr.mxu0 0.0
    %480 = vmatpush1.msra.mxu0 0.0
    %481 = vmatprep.subr.mxu0 0.0
    %482 = vmatpush1.msra.mxu0 0.0
    %483 = vmatprep.subr.mxu0 0.0
    %484 = vmatpush1.msra.mxu0 0.0
    %485 = vmatprep.subr.mxu0 0.0
    %486 = vmatpush1.msra.mxu0 0.0
    %487 = vmatprep.subr.mxu0 0.0
    %488 = vmatpush1.msra.mxu0 0.0
    %489 = vmatprep.subr.mxu0 0.0
    %490 = vmatpush1.msra.mxu0 0.0
    %491 = vmatprep.subr.mxu0 0.0
    %492 = vmatpush1.msra.mxu0 0.0
    %493 = vmatprep.subr.mxu0 0.0
    %494 = vmatpush1.msra.mxu0 0.0
    %495 = vmatprep.mubr.f32.mxu0 0.0
    %496 = vmatmul.mubr.f32.gmra.mrb[0].mxu0 %v59
    %v497 = vpop.f32.mrb[0].mxu0
    %v498 = vadd.f32 0.0, %v497
    %v499 = vpop.f32.mrb[0].mxu0
    %500 = vdwg.mxu0
    %501 = vst [vmem:[%s2] sm:$0xff] %v498
    // Predicated region
    $region14: #{critic_forward_batched.1} parent=1 // pred_check
      _
    $region15: #{critic_forward_batched.1} parent=1 // pred_check_branch
      %503 = sbr.rel (0) target = $region17
    $region16: #{critic_forward_batched.1} parent=1 // pred_region
      _
    $region17: #{critic_forward_batched.1} parent=1 // pred_fallthru
      _
    // Predicated region
    $region18: #{critic_forward_batched.1} parent=1 // pred_check
      _
    $region19: #{critic_forward_batched.1} parent=1 // pred_check_branch
      %505 = sbr.rel (0) target = $region21
    $region20: #{critic_forward_batched.1} parent=1 // pred_region
      _
    $region21: #{critic_forward_batched.1} parent=1 // pred_fallthru
      _
    %506 = vsyncpa [#allocation3], 1

</llo_original>
